<compile_context>
chip_gen: v7x
topology: tpu7x:2x2x1
jax: 0.10.0
libtpu: 0.0.40
codegen_flags: <defaults>
</compile_context>

<pallas_src>
import functools

import jax
import jax.numpy as jnp
from jax import lax
from jax.experimental import pallas as pl
from jax.experimental.pallas import tpu as pltpu

LN_EPS = 1e-5


def _round_up(a, b):
    return ((a + b - 1) // b) * b


def _cdiv(a, b):
    return (a + b - 1) // b


def _pick_tm(M, D, io_itemsize):
    """Row-tile size: big enough to amortize per-grid-step overhead, small
    enough that x/out double buffers fit a ~24 MiB budget and that >= ~4 row
    tiles exist (v7x shards the parallel row axis across 2 TensorCores)."""
    if M <= 256:
        return M                                   # single tile (full-dim block is always legal)
    budget = 24 << 20                               # bytes for x + out double buffers
    per_row = 2 * 2 * D * io_itemsize               # x + out, 2 buffers each
    tm = max(256, min(budget // max(per_row, 1), 2048 if M >= 16384 else 1024))
    tm = (tm // 256) * 256
    tm = min(tm, max(256, _round_up(_cdiv(M, 4), 256)))   # keep >= ~4 row tiles (v7x)
    return min(tm, _round_up(M, 256))


def _prenorm_residual_kernel(x_ref, w_ref, b_ref, o_ref, *, dim, matmul_dtype):
    """One (tm, D) row tile: out = LayerNorm(x) @ W' + b' + x.

    W' already has gamma folded in; b' = beta @ W + wb.  LayerNorm statistics,
    the matmul accumulator and the residual add are f32; only the matmul
    operands use `matmul_dtype` (bf16 by default) for MXU throughput.
    Rows are independent, so garbage rows of a partial (Pallas-masked) edge
    block never contaminate rows that are actually stored.
    """
    x = x_ref[...].astype(jnp.float32)                       # (tm, D)

    inv_d = jnp.float32(1.0 / dim)
    mean = jnp.sum(x, axis=-1, keepdims=True) * inv_d
    cent = x - mean
    var = jnp.sum(cent * cent, axis=-1, keepdims=True) * inv_d
    xn = cent * lax.rsqrt(var + LN_EPS)                      # f32 normalized rows

    # fn == Linear(dim, dim): MXU matmul with f32 accumulation.
    y = jnp.dot(xn.astype(matmul_dtype), w_ref[...],
                preferred_element_type=jnp.float32)

    o_ref[...] = (y + b_ref[...] + x).astype(o_ref.dtype)


def prenorm_residual(x, gamma, beta, w, wb, *, tm=None, matmul_dtype=jnp.bfloat16):
    """fn(LayerNorm(x)) + x with fn = Linear(D, D); W stored as (in, out)."""
    B, N, D = x.shape
    M = B * N
    x2 = x.reshape(M, D)                                     # free (contiguous) reshape

    io_itemsize = jnp.dtype(x.dtype).itemsize
    if tm is None:
        tm = _pick_tm(M, D, io_itemsize)
    grid_m = _cdiv(M, tm)                                    # partial edge block masked by Pallas

    # One-time exact fold of the LayerNorm affine into the Linear params:
    #   (xn*gamma + beta) @ W + wb  ==  xn @ (gamma[:,None]*W) + (beta @ W + wb)
    w32 = w.astype(jnp.float32)
    w_f = (gamma[:, None].astype(jnp.float32) * w32).astype(matmul_dtype)   # (D, D)
    b_f = (beta.astype(jnp.float32) @ w32 + wb.astype(jnp.float32)).reshape(1, D)

    # VMEM budget from the actual dtypes, clamped to the physical capacity.
    w_itemsize = jnp.dtype(matmul_dtype).itemsize
    vmem_need = (2 * tm * D * io_itemsize        # x tile, double-buffered
                 + 2 * tm * D * io_itemsize      # out tile, double-buffered
                 + D * D * w_itemsize            # W, Buffered(1)
                 + 8 * D                         # fused bias (f32), Buffered(1) + slack
                 + (4 << 20))                    # Mosaic internal scratch headroom
    try:
        phys_vmem = int(pltpu.get_tpu_info().vmem_capacity_bytes)
    except Exception:
        phys_vmem = 64 << 20                     # conservative (v7x-sized) fallback
    vmem_limit = min(max(int(vmem_need), 32 << 20), phys_vmem - (8 << 20))

    kernel = functools.partial(_prenorm_residual_kernel, dim=D,
                               matmul_dtype=matmul_dtype)

    out2 = pl.pallas_call(
        kernel,
        out_shape=jax.ShapeDtypeStruct((M, D), x.dtype),
        grid_spec=pltpu.PrefetchScalarGridSpec(
            num_scalar_prefetch=0,
            grid=(grid_m,),
            in_specs=[
                pl.BlockSpec((tm, D), lambda i: (i, 0)),          # x row tile
                pl.BlockSpec((D, D), lambda i: (0, 0),            # W (grid-invariant)
                             pipeline_mode=pl.Buffered(buffer_count=1)),
                pl.BlockSpec((1, D), lambda i: (0, 0),            # fused bias
                             pipeline_mode=pl.Buffered(buffer_count=1)),
            ],
            out_specs=pl.BlockSpec((tm, D), lambda i: (i, 0)),
        ),
        compiler_params=pltpu.CompilerParams(
            dimension_semantics=("parallel",),   # v7x: shard row tiles over 2 TCs
            vmem_limit_bytes=vmem_limit,
        ),
    )(x2, w_f, b_f)

    return out2.reshape(B, N, D)


def reference(x, gamma, beta, w, wb):
    mean = jnp.mean(x, axis=-1, keepdims=True)
    var = jnp.mean((x - mean) ** 2, axis=-1, keepdims=True)
    xn = (x - mean) * lax.rsqrt(var + LN_EPS) * gamma + beta
    return jnp.einsum("bnd,de->bne", xn, w) + wb + x


def _make_params(key, D):
    kw, kb, kg, kbe = jax.random.split(key, 4)
    # nn.LayerNorm defaults are gamma=1, beta=0; use non-trivial values so the
    # affine-fold path is actually exercised.
    gamma = 1.0 + 0.1 * jax.random.normal(kg, (D,), jnp.float32)
    beta = 0.05 * jax.random.normal(kbe, (D,), jnp.float32)
    w = jax.random.normal(kw, (D, D), jnp.float32) / jnp.sqrt(D)   # (in, out)
    wb = 0.02 * jax.random.normal(kb, (D,), jnp.float32)
    return gamma, beta, w, wb


def _check(x, gamma, beta, w, wb, tag):
    out = jax.block_until_ready(prenorm_residual(x, gamma, beta, w, wb))
    ref = reference(x, gamma, beta, w, wb)
    assert out.shape == x.shape, f"shape mismatch ({tag})"
    # bf16 matmul operands (f32 accumulation) -> loosened tolerance vs f32 ref.
    assert jnp.allclose(out, ref, atol=2e-2, rtol=2e-2), f"value mismatch ({tag})"


if __name__ == "__main__":
    key = jax.random.PRNGKey(0)
    k1, k2, k3, kp1, kp2, kp3 = jax.random.split(key, 6)

    # Main config: lane-dense D (=128), multiple row tiles (tm=256, grid=3).
    B, N, D = 2, 384, 128
    x = jax.random.normal(k1, (B, N, D), jnp.float32)
    gamma, beta, w, wb = _make_params(kp1, D)
    _check(x, gamma, beta, w, wb, "main")

    # Small config: D=96 (block last dim == full array dim, no padding),
    # M=32 single full-extent row tile.
    B2, N2, D2 = 2, 16, 96
    x2 = jax.random.normal(k2, (B2, N2, D2), jnp.float32)
    gamma2, beta2, w2, wb2 = _make_params(kp2, D2)
    _check(x2, gamma2, beta2, w2, wb2, "small-D")

    # Ragged config: M=300 not a multiple of tm -> Pallas-masked partial edge
    # block (the path that replaced the wrapper-side pad/slice).
    B3, N3, D3 = 3, 100, 128
    x3 = jax.random.normal(k3, (B3, N3, D3), jnp.float32)
    gamma3, beta3, w3, wb3 = _make_params(kp3, D3)
    _check(x3, gamma3, beta3, w3, wb3, "ragged-M")

    print("KERNEL_OK")
</pallas_src>

<mosaic_0001>
module attributes {stable_mosaic.version = 11 : i64} {
  func.func @_prenorm_residual_kernel(%arg0: i32, %arg1: memref<256x128xf32, #tpu.memory_space<vmem>>, %arg2: memref<128x128xbf16, #tpu.memory_space<vmem>>, %arg3: memref<1x128xf32, #tpu.memory_space<vmem>>, %arg4: memref<256x128xf32, #tpu.memory_space<vmem>>) attributes {dimension_semantics = [#tpu.dimension_semantics<parallel>], iteration_bounds = array<i64: 3>, scalar_prefetch = 0 : i64, scratch_operands = 0 : i64, tpu.core_type = #tpu.core_type<tc>, window_params = [{transform_indices = @transform_0, window_bounds = array<i64: 256, 128>}, {pipeline_mode = #tpu.pipeline_mode<synchronous>, transform_indices = @transform_1, window_bounds = array<i64: 128, 128>}, {pipeline_mode = #tpu.pipeline_mode<synchronous>, transform_indices = @transform_2, window_bounds = array<i64: 1, 128>}, {transform_indices = @transform_3, window_bounds = array<i64: 256, 128>}]} {
    %c0 = arith.constant 0 : index
    %c0_0 = arith.constant 0 : index
    %0 = vector.load %arg1[%c0, %c0_0] : memref<256x128xf32, #tpu.memory_space<vmem>>, vector<256x128xf32>
    %cst = arith.constant dense<0.000000e+00> : vector<256xf32>
    %1 = vector.multi_reduction <add>, %0, %cst [1] : vector<256x128xf32> to vector<256xf32>
    %2 = vector.shape_cast %1 : vector<256xf32> to vector<256x1xf32>
    %cst_1 = arith.constant 7.812500e-03 : f32
    %3 = vector.broadcast %cst_1 : f32 to vector<256x1xf32>
    %4 = arith.mulf %2, %3 : vector<256x1xf32>
    %5 = vector.broadcast %4 : vector<256x1xf32> to vector<256x128xf32>
    %6 = arith.subf %0, %5 : vector<256x128xf32>
    %7 = arith.mulf %6, %6 : vector<256x128xf32>
    %cst_2 = arith.constant dense<0.000000e+00> : vector<256xf32>
    %8 = vector.multi_reduction <add>, %7, %cst_2 [1] : vector<256x128xf32> to vector<256xf32>
    %9 = vector.shape_cast %8 : vector<256xf32> to vector<256x1xf32>
    %cst_3 = arith.constant 7.812500e-03 : f32
    %10 = vector.broadcast %cst_3 : f32 to vector<256x1xf32>
    %11 = arith.mulf %9, %10 : vector<256x1xf32>
    %cst_4 = arith.constant 9.99999974E-6 : f32
    %12 = vector.broadcast %cst_4 : f32 to vector<256x1xf32>
    %13 = arith.addf %11, %12 : vector<256x1xf32>
    %14 = math.rsqrt %13 : vector<256x1xf32>
    %15 = vector.broadcast %14 : vector<256x1xf32> to vector<256x128xf32>
    %16 = arith.mulf %6, %15 : vector<256x128xf32>
    %17 = arith.truncf %16 : vector<256x128xf32> to vector<256x128xbf16>
    %c0_5 = arith.constant 0 : index
    %c0_6 = arith.constant 0 : index
    %18 = vector.load %arg2[%c0_5, %c0_6] : memref<128x128xbf16, #tpu.memory_space<vmem>>, vector<128x128xbf16>
    %cst_7 = arith.constant dense<0.000000e+00> : vector<256x128xf32>
    %19 = tpu.matmul %17, %18, %cst_7 {dimension_numbers = #tpu.dot_dimension_numbers<[1], [0], [0], [1], [0, 0, 1, 1], [], []>} : vector<256x128xbf16>, vector<128x128xbf16>, vector<256x128xf32> -> vector<256x128xf32>
    %c0_8 = arith.constant 0 : index
    %c0_9 = arith.constant 0 : index
    %20 = vector.load %arg3[%c0_8, %c0_9] : memref<1x128xf32, #tpu.memory_space<vmem>>, vector<1x128xf32>
    %21 = vector.broadcast %20 : vector<1x128xf32> to vector<256x128xf32>
    %22 = arith.addf %19, %21 : vector<256x128xf32>
    %23 = arith.addf %22, %0 : vector<256x128xf32>
    %c0_10 = arith.constant 0 : index
    %c0_11 = arith.constant 0 : index
    %24 = vector.load %arg4[%c0_10, %c0_11] : memref<256x128xf32, #tpu.memory_space<vmem>>, vector<256x128xf32>
    tpu.vector_store %arg4[%c0_10, %c0_11], %23 {strides = array<i32>} : memref<256x128xf32, #tpu.memory_space<vmem>>, vector<256x128xf32>,
    return
  }
  func.func @transform_0(%arg0: i32) -> (i32, i32) {
    %c0_i32 = arith.constant 0 : i32
    %c0_i32_0 = arith.constant 0 : i32
    return %arg0, %c0_i32 : i32, i32
  }
  func.func @transform_1(%arg0: i32) -> (i32, i32) {
    %c0_i32 = arith.constant 0 : i32
    %c0_i32_0 = arith.constant 0 : i32
    %c0_i32_1 = arith.constant 0 : i32
    return %c0_i32, %c0_i32_0 : i32, i32
  }
  func.func @transform_2(%arg0: i32) -> (i32, i32) {
    %c0_i32 = arith.constant 0 : i32
    %c0_i32_0 = arith.constant 0 : i32
    %c0_i32_1 = arith.constant 0 : i32
    return %c0_i32, %c0_i32_0 : i32, i32
  }
  func.func @transform_3(%arg0: i32) -> (i32, i32) {
    %c0_i32 = arith.constant 0 : i32
    %c0_i32_0 = arith.constant 0 : i32
    return %arg0, %c0_i32 : i32, i32
  }
}

</mosaic_0001>

<llo_original>
// kernel: tpu_custom_call.1
$region0: #{tpu_custom_call.1}
  #allocation0 [shape = 'u32[]', space=smem, size = 0x4, offset = 0x4, fixed_abs, tag = 'smem constant byte address 0x4 - core index']
  #allocation1 [shape = 'u32[144,128]{1,0:T(1,128)}', space=vmem, size = 0x12000, scoped, tag = 'internal scratch']
  %s0 = inlined_call_operand.hbm [shape: f32[768,128], index: 0, kind: input, shape index: {}]
  %s1 = inlined_call_operand.hbm [shape: bf16[128,128], index: 1, kind: input, shape index: {}]
  %s2 = inlined_call_operand.vmem [shape: f32[1,128], index: 2, kind: input, shape index: {}]
  %s3 = inlined_call_operand.hbm [shape: f32[768,128], index: 3, kind: output, shape index: {}]
  %s4 = sld [smem:[#allocation0]]
  $region53: #{tpu_custom_call.1} parent=0
    _
  %s6 = ssub.s32 1, %s4
  %s7 = scalar_select 0, %s6, %s4
  $region1: #{tpu_custom_call.1} parent=0
    #allocation2 [shape = 'u8[262144]{0}', space=vmem, size = 0x40000, scoped, tag = 'input window, operand 0']
    #allocation3 [shape = 's32[2]{0}', space=sflag, size = 0x8, scoped, tag = 'scoped memory for tpu_custom_call.1']
    #allocation4 [shape = 's32[2]{0}', space=sflag, size = 0x8, scoped, tag = 'scoped memory for tpu_custom_call.1']
    #allocation5 [shape = 'u8[32768]{0}', space=vmem, size = 0x8000, scoped, tag = 'input window, operand 1, single buffered']
    #allocation6 [shape = 's32[1]{0}', space=sflag, size = 0x4, scoped, tag = 'scoped memory for tpu_custom_call.1']
    #allocation7 [shape = 'u8[262144]{0}', space=vmem, size = 0x40000, scoped, tag = 'output window, operand 0']
    %8 = vsyncpa [#allocation3], 0
    %s9 = scalar_lea.sflag [#allocation3], 1
    %10 = vsyncpa %s9, 0
    %11 = vsyncpa [#allocation6], 0
    %12 = vsyncpa [#allocation4], 0
    %s13 = scalar_lea.sflag [#allocation4], 1
    %14 = vsyncpa %s13, 0
    loop: start=0, step=1, limit=5
    $region2: #{tpu_custom_call.1} parent=1 // loop_pre_header
      _
    $region3: #{tpu_custom_call.1} parent=1 // loop_header
      %s16 = sphi 0, %s20
      %p17 = scmp.ge.s32.totalorder %s16, 5
      %s26 = sphi 0, %s28
      %s29 = sphi 0, %s26
      %s30 = sphi 0, %s29
      %s46 = sphi 0, %s30
      %s50 = sphi 0, %s50
      %s52 = sphi 0, %s50
      %s53 = sphi 0, %s52
      %s67 = sphi 0, %s53
      %s71 = sphi 0, %s71
      %s73 = sphi 0, %s71
      %s74 = sphi 0, %s73
      %s88 = sphi 0, %s74
      %s94 = sphi 0, %s96
      %s97 = sphi 0, %s94
      %s98 = sphi 0, %s97
      %s114 = sphi 0, %s98
    $region4: #{tpu_custom_call.1} parent=1 // loop_header_branch
      %19 = sbr.rel (%p17) target = $region8
    $region5: #{tpu_custom_call.1} parent=1 // loop_body
      %s21 = ssub.s32 %s16, 1
      %s22 = ssub.s32 %s16, 2
      %s23 = sadd.s32 %s16, 1
      %s24 = ssub.s32 %s16, %s23
      %p25 = scmp.eq.s32.totalorder %s24, 0
      %s27 = sadd.s32 %s26, 1
      %s28 = scalar_select %p25, %s26, %s27
      %p31 = pneg %p25
      %p32 = scmp.eq.s32.totalorder %s16, 2
      %p33 = por %p31, %p32
      %p34 = scmp.ne.s32.totalorder %s26, %s29
      %p35 = scmp.eq.s32.totalorder %s16, 0
      %p36 = por %p34, %p35
      %p37 = scmp.ne.s32.totalorder %s26, %s29
      %p38 = scmp.eq.s32.totalorder %s21, 2
      %p39 = por %p37, %p38
      %p40 = scmp.ne.s32.totalorder %s29, %s30
      %p41 = scmp.eq.s32.totalorder %s21, 0
      %p42 = por %p40, %p41
      %p43 = scmp.ne.s32.totalorder %s29, %s30
      %p44 = scmp.eq.s32.totalorder %s22, 2
      %p45 = por %p43, %p44
      %p47 = scmp.ne.s32.totalorder %s30, %s46
      %p48 = scmp.eq.s32.totalorder %s22, 0
      %p49 = por %p47, %p48
      %s51 = sadd.s32 %s50, 1
      %p54 = scmp.eq.s32.totalorder %s16, 2
      %p55 = scmp.ne.s32.totalorder %s50, %s52
      %p56 = scmp.eq.s32.totalorder %s16, 0
      %p57 = por %p55, %p56
      %p58 = scmp.ne.s32.totalorder %s50, %s52
      %p59 = scmp.eq.s32.totalorder %s21, 2
      %p60 = por %p58, %p59
      %p61 = scmp.ne.s32.totalorder %s52, %s53
      %p62 = scmp.eq.s32.totalorder %s21, 0
      %p63 = por %p61, %p62
      %p64 = scmp.ne.s32.totalorder %s52, %s53
      %p65 = scmp.eq.s32.totalorder %s22, 2
      %p66 = por %p64, %p65
      %p68 = scmp.ne.s32.totalorder %s53, %s67
      %p69 = scmp.eq.s32.totalorder %s22, 0
      %p70 = por %p68, %p69
      %s72 = sadd.s32 %s71, 1
      %p75 = scmp.eq.s32.totalorder %s16, 2
      %p76 = scmp.ne.s32.totalorder %s71, %s73
      %p77 = scmp.eq.s32.totalorder %s16, 0
      %p78 = por %p76, %p77
      %p79 = scmp.ne.s32.totalorder %s71, %s73
      %p80 = scmp.eq.s32.totalorder %s21, 2
      %p81 = por %p79, %p80
      %p82 = scmp.ne.s32.totalorder %s73, %s74
      %p83 = scmp.eq.s32.totalorder %s21, 0
      %p84 = por %p82, %p83
      %p85 = scmp.ne.s32.totalorder %s73, %s74
      %p86 = scmp.eq.s32.totalorder %s22, 2
      %p87 = por %p85, %p86
      %p89 = scmp.ne.s32.totalorder %s74, %s88
      %p90 = scmp.eq.s32.totalorder %s22, 0
      %p91 = por %p89, %p90
      %s92 = ssub.s32 %s16, %s23
      %p93 = scmp.eq.s32.totalorder %s92, 0
      %s95 = sadd.s32 %s94, 1
      %s96 = scalar_select %p93, %s94, %s95
      %p99 = pneg %p93
      %p100 = scmp.eq.s32.totalorder %s16, 2
      %p101 = por %p99, %p100
      %p102 = scmp.ne.s32.totalorder %s94, %s97
      %p103 = scmp.eq.s32.totalorder %s16, 0
      %p104 = por %p102, %p103
      %p105 = scmp.ne.s32.totalorder %s94, %s97
      %p106 = scmp.eq.s32.totalorder %s21, 2
      %p107 = por %p105, %p106
      %p108 = scmp.ne.s32.totalorder %s97, %s98
      %p109 = scmp.eq.s32.totalorder %s21, 0
      %p110 = por %p108, %p109
      %p111 = scmp.ne.s32.totalorder %s97, %s98
      %p112 = scmp.eq.s32.totalorder %s22, 2
      %p113 = por %p111, %p112
      %p115 = scmp.ne.s32.totalorder %s98, %s114
      %p116 = scmp.eq.s32.totalorder %s22, 0
      %p117 = por %p115, %p116
      %p118 = scmp.le.s32.totalorder 1, %s16
      %p119 = scmp.lt.s32.totalorder %s16, 4
      %p120 = pnand %p118, %p119
      %p121 = pneg %p120
      // Predicated region
      $region9: #{tpu_custom_call.1} parent=5 // pred_check
        _
      $region10: #{tpu_custom_call.1} parent=5 // pred_check_branch
        %123 = sbr.rel (%p120) target = $region12
      $region11: #{tpu_custom_call.1} parent=5 // pred_region
        %s124 = ssub.s32 %s16, 1
        // Predicated region
        $region13: #{tpu_custom_call.1} parent=11 // pred_check
          %p125 = pneg %p63
        $region14: #{tpu_custom_call.1} parent=11 // pred_check_branch
          %127 = sbr.rel (%p125) target = $region16
        $region15: #{tpu_custom_call.1} parent=11 // pred_region
          %s129 = ssub.s32 1024, 1024
          %130 = vsyncadd [#allocation6], %s129
          %s131 = sshll.u32 [#allocation5], 4
          %s132 = int_to_ptr.vmem [resolvable:$true] %s131
          %137 = dma.hbm_to_vmem [thread:$0]  %s1, 1024, %s132, [#allocation6], 64, 64, 4
        $region16: #{tpu_custom_call.1} parent=11 // pred_fallthru
          _
        // Predicated region
        $region17: #{tpu_custom_call.1} parent=11 // pred_check
          %p138 = pneg %p84
        $region18: #{tpu_custom_call.1} parent=11 // pred_check_branch
          %140 = sbr.rel (%p138) target = $region20
        $region19: #{tpu_custom_call.1} parent=11 // pred_region
          _
        $region20: #{tpu_custom_call.1} parent=11 // pred_fallthru
          _
      $region12: #{tpu_custom_call.1} parent=5 // pred_fallthru
        _
      %p141 = scmp.lt.s32.totalorder %s16, 3
      // Predicated region
      $region21: #{tpu_custom_call.1} parent=5 // pred_check
        %p142 = pneg %p141
      $region22: #{tpu_custom_call.1} parent=5 // pred_check_branch
        %144 = sbr.rel (%p142) target = $region24
      $region23: #{tpu_custom_call.1} parent=5 // pred_region
        // Predicated region
        $region25: #{tpu_custom_call.1} parent=23 // pred_check
          %p145 = pneg %p36
        $region26: #{tpu_custom_call.1} parent=23 // pred_check_branch
          %147 = sbr.rel (%p145) target = $region28
        $region27: #{tpu_custom_call.1} parent=23 // pred_region
          %s148 = sand.u32 %s26, 1
          %s149 = scalar_lea.sflag [#allocation3], %s148
          %s150 = sand.u32 %s26, 1
          %s151 = smul.addr %s150, 256
          %s152 = scalar_lea.vmem [#allocation2], %s151
          %s153 = smul.u32 32, %s16
          %s155 = ssub.s32 4096, 4096
          %156 = vsyncadd %s149, %s155
          %s157 = smul.addr %s153, 128
          %s158 = scalar_lea.hbm %s0, %s157
          %s159 = sshll.u32 %s152, 4
          %s160 = int_to_ptr.vmem [resolvable:$true] %s159
          %165 = dma.hbm_to_vmem [thread:$0]  %s158, 4096, %s160, %s149, 128, 128, 8
        $region28: #{tpu_custom_call.1} parent=23 // pred_fallthru
          _
      $region24: #{tpu_custom_call.1} parent=5 // pred_fallthru
        _
      %p166 = scmp.le.s32.totalorder 1, %s16
      %p167 = scmp.lt.s32.totalorder %s16, 4
      %p168 = pnand %p166, %p167
      %p169 = pneg %p168
      // Predicated region
      $region29: #{tpu_custom_call.1} parent=5 // pred_check
        _
      $region30: #{tpu_custom_call.1} parent=5 // pred_check_branch
        %171 = sbr.rel (%p168) target = $region32
      $region31: #{tpu_custom_call.1} parent=5 // pred_region
        %s172 = ssub.s32 %s16, 1
        %s173 = sand.u32 %s29, 1
        %s174 = scalar_lea.sflag [#allocation3], %s173
        %s175 = sand.u32 %s29, 1
        %s176 = smul.addr %s175, 256
        %s177 = scalar_lea.vmem [#allocation2], %s176
        // Predicated region
        $region33: #{tpu_custom_call.1} parent=31 // pred_check
          %p178 = pneg %p42
        $region34: #{tpu_custom_call.1} parent=31 // pred_check_branch
          %180 = sbr.rel (%p178) target = $region36
        $region35: #{tpu_custom_call.1} parent=31 // pred_region
          %181 = dma.done %s174, 4096
        $region36: #{tpu_custom_call.1} parent=31 // pred_fallthru
          _
        // Predicated region
        $region37: #{tpu_custom_call.1} parent=31 // pred_check
          %p182 = pneg %p63
        $region38: #{tpu_custom_call.1} parent=31 // pred_check_branch
          %184 = sbr.rel (%p182) target = $region40
        $region39: #{tpu_custom_call.1} parent=31 // pred_region
          %185 = dma.done [#allocation6], 1024
        $region40: #{tpu_custom_call.1} parent=31 // pred_fallthru
          _
        %s186 = sand.u32 %s29, 1
        %s187 = scalar_lea.sflag [#allocation3], %s186
        %s188 = sand.u32 %s29, 1
        %s189 = smul.addr %s188, 256
        %s190 = scalar_lea.vmem [#allocation2], %s189
        %p191 = pneg %p42
        %p192 = pneg %p39
        %p193 = pneg %p63
        %p194 = pneg %p60
        %p195 = pneg %p84
        %p196 = pneg %p81
        %p197 = pneg %p110
        %p198 = pneg %p107
        %s199 = sand.u32 %s97, 1
        %s200 = scalar_lea.sflag [#allocation4], %s199
        %s201 = sand.u32 %s97, 1
        %s202 = smul.addr %s201, 256
        %s203 = scalar_lea.vmem [#allocation7], %s202
        %s204 = smul.u32 32, %s21
        %s205 = smul.u32 32, %s21
        %v207 = vld [vmem:[%s177] sm:$0xff]
        %v208 = vld [vmem:[%s177 + $0x8] sm:$0xff]
        %v209 = vld [vmem:[%s177 + $0x10] sm:$0xff]
        %v210 = vld [vmem:[%s177 + $0x18] sm:$0xff]
        %v211 = vld [vmem:[%s177 + $0x20] sm:$0xff]
        %v212 = vld [vmem:[%s177 + $0x28] sm:$0xff]
        %v213 = vld [vmem:[%s177 + $0x30] sm:$0xff]
        %v214 = vld [vmem:[%s177 + $0x38] sm:$0xff]
        %v215 = vld [vmem:[%s177 + $0x40] sm:$0xff]
        %v216 = vld [vmem:[%s177 + $0x48] sm:$0xff]
        %v217 = vld [vmem:[%s177 + $0x50] sm:$0xff]
        %v218 = vld [vmem:[%s177 + $0x58] sm:$0xff]
        %v219 = vld [vmem:[%s177 + $0x60] sm:$0xff]
        %v220 = vld [vmem:[%s177 + $0x68] sm:$0xff]
        %v221 = vld [vmem:[%s177 + $0x70] sm:$0xff]
        %v222 = vld [vmem:[%s177 + $0x78] sm:$0xff]
        %v223 = vld [vmem:[%s177 + $0x80] sm:$0xff]
        %v224 = vld [vmem:[%s177 + $0x88] sm:$0xff]
        %v225 = vld [vmem:[%s177 + $0x90] sm:$0xff]
        %v226 = vld [vmem:[%s177 + $0x98] sm:$0xff]
        %v227 = vld [vmem:[%s177 + $0xa0] sm:$0xff]
        %v228 = vld [vmem:[%s177 + $0xa8] sm:$0xff]
        %v229 = vld [vmem:[%s177 + $0xb0] sm:$0xff]
        %v230 = vld [vmem:[%s177 + $0xb8] sm:$0xff]
        %v231 = vld [vmem:[%s177 + $0xc0] sm:$0xff]
        %v232 = vld [vmem:[%s177 + $0xc8] sm:$0xff]
        %v233 = vld [vmem:[%s177 + $0xd0] sm:$0xff]
        %v234 = vld [vmem:[%s177 + $0xd8] sm:$0xff]
        %v235 = vld [vmem:[%s177 + $0xe0] sm:$0xff]
        %v236 = vld [vmem:[%s177 + $0xe8] sm:$0xff]
        %v237 = vld [vmem:[%s177 + $0xf0] sm:$0xff]
        %v238 = vld [vmem:[%s177 + $0xf8] sm:$0xff]
        %239 = vadd.xlane.f32.xlu0 %v207
        %v240 = vpop.xlane.xlu0 %239
        %241 = vadd.xlane.f32.xlu0 %v208
        %v242 = vpop.xlane.xlu0 %241
        %243 = vadd.xlane.f32.xlu0 %v209
        %v244 = vpop.xlane.xlu0 %243
        %245 = vadd.xlane.f32.xlu0 %v210
        %v246 = vpop.xlane.xlu0 %245
        %247 = vadd.xlane.f32.xlu0 %v211
        %v248 = vpop.xlane.xlu0 %247
        %249 = vadd.xlane.f32.xlu0 %v212
        %v250 = vpop.xlane.xlu0 %249
        %251 = vadd.xlane.f32.xlu0 %v213
        %v252 = vpop.xlane.xlu0 %251
        %253 = vadd.xlane.f32.xlu0 %v214
        %v254 = vpop.xlane.xlu0 %253
        %255 = vadd.xlane.f32.xlu0 %v215
        %v256 = vpop.xlane.xlu0 %255
        %257 = vadd.xlane.f32.xlu0 %v216
        %v258 = vpop.xlane.xlu0 %257
        %259 = vadd.xlane.f32.xlu0 %v217
        %v260 = vpop.xlane.xlu0 %259
        %261 = vadd.xlane.f32.xlu0 %v218
        %v262 = vpop.xlane.xlu0 %261
        %263 = vadd.xlane.f32.xlu0 %v219
        %v264 = vpop.xlane.xlu0 %263
        %265 = vadd.xlane.f32.xlu0 %v220
        %v266 = vpop.xlane.xlu0 %265
        %267 = vadd.xlane.f32.xlu0 %v221
        %v268 = vpop.xlane.xlu0 %267
        %269 = vadd.xlane.f32.xlu0 %v222
        %v270 = vpop.xlane.xlu0 %269
        %271 = vadd.xlane.f32.xlu0 %v223
        %v272 = vpop.xlane.xlu0 %271
        %273 = vadd.xlane.f32.xlu0 %v224
        %v274 = vpop.xlane.xlu0 %273
        %275 = vadd.xlane.f32.xlu0 %v225
        %v276 = vpop.xlane.xlu0 %275
        %277 = vadd.xlane.f32.xlu0 %v226
        %v278 = vpop.xlane.xlu0 %277
        %279 = vadd.xlane.f32.xlu0 %v227
        %v280 = vpop.xlane.xlu0 %279
        %281 = vadd.xlane.f32.xlu0 %v228
        %v282 = vpop.xlane.xlu0 %281
        %283 = vadd.xlane.f32.xlu0 %v229
        %v284 = vpop.xlane.xlu0 %283
        %285 = vadd.xlane.f32.xlu0 %v230
        %v286 = vpop.xlane.xlu0 %285
        %287 = vadd.xlane.f32.xlu0 %v231
        %v288 = vpop.xlane.xlu0 %287
        %289 = vadd.xlane.f32.xlu0 %v232
        %v290 = vpop.xlane.xlu0 %289
        %291 = vadd.xlane.f32.xlu0 %v233
        %v292 = vpop.xlane.xlu0 %291
        %293 = vadd.xlane.f32.xlu0 %v234
        %v294 = vpop.xlane.xlu0 %293
        %295 = vadd.xlane.f32.xlu0 %v235
        %v296 = vpop.xlane.xlu0 %295
        %297 = vadd.xlane.f32.xlu0 %v236
        %v298 = vpop.xlane.xlu0 %297
        %299 = vadd.xlane.f32.xlu0 %v237
        %v300 = vpop.xlane.xlu0 %299
        %301 = vadd.xlane.f32.xlu0 %v238
        %v302 = vpop.xlane.xlu0 %301
        %v303 = vmul.f32 %v240, 0.0078125
        %v304 = vmul.f32 %v242, 0.0078125
        %v305 = vmul.f32 %v244, 0.0078125
        %v306 = vmul.f32 %v246, 0.0078125
        %v307 = vmul.f32 %v248, 0.0078125
        %v308 = vmul.f32 %v250, 0.0078125
        %v309 = vmul.f32 %v252, 0.0078125
        %v310 = vmul.f32 %v254, 0.0078125
        %v311 = vmul.f32 %v256, 0.0078125
        %v312 = vmul.f32 %v258, 0.0078125
        %v313 = vmul.f32 %v260, 0.0078125
        %v314 = vmul.f32 %v262, 0.0078125
        %v315 = vmul.f32 %v264, 0.0078125
        %v316 = vmul.f32 %v266, 0.0078125
        %v317 = vmul.f32 %v268, 0.0078125
        %v318 = vmul.f32 %v270, 0.0078125
        %v319 = vmul.f32 %v272, 0.0078125
        %v320 = vmul.f32 %v274, 0.0078125
        %v321 = vmul.f32 %v276, 0.0078125
        %v322 = vmul.f32 %v278, 0.0078125
        %v323 = vmul.f32 %v280, 0.0078125
        %v324 = vmul.f32 %v282, 0.0078125
        %v325 = vmul.f32 %v284, 0.0078125
        %v326 = vmul.f32 %v286, 0.0078125
        %v327 = vmul.f32 %v288, 0.0078125
        %v328 = vmul.f32 %v290, 0.0078125
        %v329 = vmul.f32 %v292, 0.0078125
        %v330 = vmul.f32 %v294, 0.0078125
        %v331 = vmul.f32 %v296, 0.0078125
        %v332 = vmul.f32 %v298, 0.0078125
        %v333 = vmul.f32 %v300, 0.0078125
        %v334 = vmul.f32 %v302, 0.0078125
        %v335 = vsub.f32 %v207, %v303
        %v336 = vsub.f32 %v208, %v304
        %v337 = vsub.f32 %v209, %v305
        %v338 = vsub.f32 %v210, %v306
        %v339 = vsub.f32 %v211, %v307
        %v340 = vsub.f32 %v212, %v308
        %v341 = vsub.f32 %v213, %v309
        %v342 = vsub.f32 %v214, %v310
        %v343 = vsub.f32 %v215, %v311
        %v344 = vsub.f32 %v216, %v312
        %v345 = vsub.f32 %v217, %v313
        %v346 = vsub.f32 %v218, %v314
        %v347 = vsub.f32 %v219, %v315
        %v348 = vsub.f32 %v220, %v316
        %v349 = vsub.f32 %v221, %v317
        %v350 = vsub.f32 %v222, %v318
        %v351 = vsub.f32 %v223, %v319
        %v352 = vsub.f32 %v224, %v320
        %v353 = vsub.f32 %v225, %v321
        %v354 = vsub.f32 %v226, %v322
        %v355 = vsub.f32 %v227, %v323
        %v356 = vsub.f32 %v228, %v324
        %v357 = vsub.f32 %v229, %v325
        %v358 = vsub.f32 %v230, %v326
        %v359 = vsub.f32 %v231, %v327
        %v360 = vsub.f32 %v232, %v328
        %v361 = vsub.f32 %v233, %v329
        %v362 = vsub.f32 %v234, %v330
        %v363 = vsub.f32 %v235, %v331
        %v364 = vsub.f32 %v236, %v332
        %v365 = vsub.f32 %v237, %v333
        %v366 = vsub.f32 %v238, %v334
        %v367 = vmul.f32 %v335, %v335
        %v368 = vmul.f32 %v336, %v336
        %v369 = vmul.f32 %v337, %v337
        %v370 = vmul.f32 %v338, %v338
        %v371 = vmul.f32 %v339, %v339
        %v372 = vmul.f32 %v340, %v340
        %v373 = vmul.f32 %v341, %v341
        %v374 = vmul.f32 %v342, %v342
        %v375 = vmul.f32 %v343, %v343
        %v376 = vmul.f32 %v344, %v344
        %v377 = vmul.f32 %v345, %v345
        %v378 = vmul.f32 %v346, %v346
        %v379 = vmul.f32 %v347, %v347
        %v380 = vmul.f32 %v348, %v348
        %v381 = vmul.f32 %v349, %v349
        %v382 = vmul.f32 %v350, %v350
        %v383 = vmul.f32 %v351, %v351
        %v384 = vmul.f32 %v352, %v352
        %v385 = vmul.f32 %v353, %v353
        %v386 = vmul.f32 %v354, %v354
        %v387 = vmul.f32 %v355, %v355
        %v388 = vmul.f32 %v356, %v356
        %v389 = vmul.f32 %v357, %v357
        %v390 = vmul.f32 %v358, %v358
        %v391 = vmul.f32 %v359, %v359
        %v392 = vmul.f32 %v360, %v360
        %v393 = vmul.f32 %v361, %v361
        %v394 = vmul.f32 %v362, %v362
        %v395 = vmul.f32 %v363, %v363
        %v396 = vmul.f32 %v364, %v364
        %v397 = vmul.f32 %v365, %v365
        %v398 = vmul.f32 %v366, %v366
        %399 = vadd.xlane.f32.xlu0 %v367
        %v400 = vpop.xlane.xlu0 %399
        %401 = vadd.xlane.f32.xlu0 %v368
        %v402 = vpop.xlane.xlu0 %401
        %403 = vadd.xlane.f32.xlu0 %v369
        %v404 = vpop.xlane.xlu0 %403
        %405 = vadd.xlane.f32.xlu0 %v370
        %v406 = vpop.xlane.xlu0 %405
        %407 = vadd.xlane.f32.xlu0 %v371
        %v408 = vpop.xlane.xlu0 %407
        %409 = vadd.xlane.f32.xlu0 %v372
        %v410 = vpop.xlane.xlu0 %409
        %411 = vadd.xlane.f32.xlu0 %v373
        %v412 = vpop.xlane.xlu0 %411
        %413 = vadd.xlane.f32.xlu0 %v374
        %v414 = vpop.xlane.xlu0 %413
        %415 = vadd.xlane.f32.xlu0 %v375
        %v416 = vpop.xlane.xlu0 %415
        %417 = vadd.xlane.f32.xlu0 %v376
        %v418 = vpop.xlane.xlu0 %417
        %419 = vadd.xlane.f32.xlu0 %v377
        %v420 = vpop.xlane.xlu0 %419
        %421 = vadd.xlane.f32.xlu0 %v378
        %v422 = vpop.xlane.xlu0 %421
        %423 = vadd.xlane.f32.xlu0 %v379
        %v424 = vpop.xlane.xlu0 %423
        %425 = vadd.xlane.f32.xlu0 %v380
        %v426 = vpop.xlane.xlu0 %425
        %427 = vadd.xlane.f32.xlu0 %v381
        %v428 = vpop.xlane.xlu0 %427
        %429 = vadd.xlane.f32.xlu0 %v382
        %v430 = vpop.xlane.xlu0 %429
        %431 = vadd.xlane.f32.xlu0 %v383
        %v432 = vpop.xlane.xlu0 %431
        %433 = vadd.xlane.f32.xlu0 %v384
        %v434 = vpop.xlane.xlu0 %433
        %435 = vadd.xlane.f32.xlu0 %v385
        %v436 = vpop.xlane.xlu0 %435
        %437 = vadd.xlane.f32.xlu0 %v386
        %v438 = vpop.xlane.xlu0 %437
        %439 = vadd.xlane.f32.xlu0 %v387
        %v440 = vpop.xlane.xlu0 %439
        %441 = vadd.xlane.f32.xlu0 %v388
        %v442 = vpop.xlane.xlu0 %441
        %443 = vadd.xlane.f32.xlu0 %v389
        %v444 = vpop.xlane.xlu0 %443
        %445 = vadd.xlane.f32.xlu0 %v390
        %v446 = vpop.xlane.xlu0 %445
        %447 = vadd.xlane.f32.xlu0 %v391
        %v448 = vpop.xlane.xlu0 %447
        %449 = vadd.xlane.f32.xlu0 %v392
        %v450 = vpop.xlane.xlu0 %449
        %451 = vadd.xlane.f32.xlu0 %v393
        %v452 = vpop.xlane.xlu0 %451
        %453 = vadd.xlane.f32.xlu0 %v394
        %v454 = vpop.xlane.xlu0 %453
        %455 = vadd.xlane.f32.xlu0 %v395
        %v456 = vpop.xlane.xlu0 %455
        %457 = vadd.xlane.f32.xlu0 %v396
        %v458 = vpop.xlane.xlu0 %457
        %459 = vadd.xlane.f32.xlu0 %v397
        %v460 = vpop.xlane.xlu0 %459
        %461 = vadd.xlane.f32.xlu0 %v398
        %v462 = vpop.xlane.xlu0 %461
        %v463 = vmul.f32 %v400, 0.0078125
        %v464 = vmul.f32 %v402, 0.0078125
        %v465 = vmul.f32 %v404, 0.0078125
        %v466 = vmul.f32 %v406, 0.0078125
        %v467 = vmul.f32 %v408, 0.0078125
        %v468 = vmul.f32 %v410, 0.0078125
        %v469 = vmul.f32 %v412, 0.0078125
        %v470 = vmul.f32 %v414, 0.0078125
        %v471 = vmul.f32 %v416, 0.0078125
        %v472 = vmul.f32 %v418, 0.0078125
        %v473 = vmul.f32 %v420, 0.0078125
        %v474 = vmul.f32 %v422, 0.0078125
        %v475 = vmul.f32 %v424, 0.0078125
        %v476 = vmul.f32 %v426, 0.0078125
        %v477 = vmul.f32 %v428, 0.0078125
        %v478 = vmul.f32 %v430, 0.0078125
        %v479 = vmul.f32 %v432, 0.0078125
        %v480 = vmul.f32 %v434, 0.0078125
        %v481 = vmul.f32 %v436, 0.0078125
        %v482 = vmul.f32 %v438, 0.0078125
        %v483 = vmul.f32 %v440, 0.0078125
        %v484 = vmul.f32 %v442, 0.0078125
        %v485 = vmul.f32 %v444, 0.0078125
        %v486 = vmul.f32 %v446, 0.0078125
        %v487 = vmul.f32 %v448, 0.0078125
        %v488 = vmul.f32 %v450, 0.0078125
        %v489 = vmul.f32 %v452, 0.0078125
        %v490 = vmul.f32 %v454, 0.0078125
        %v491 = vmul.f32 %v456, 0.0078125
        %v492 = vmul.f32 %v458, 0.0078125
        %v493 = vmul.f32 %v460, 0.0078125
        %v494 = vmul.f32 %v462, 0.0078125
        %v495 = vadd.f32 %v463, 1e-05
        %v496 = vadd.f32 %v464, 1e-05
        %v497 = vadd.f32 %v465, 1e-05
        %v498 = vadd.f32 %v466, 1e-05
        %v499 = vadd.f32 %v467, 1e-05
        %v500 = vadd.f32 %v468, 1e-05
        %v501 = vadd.f32 %v469, 1e-05
        %v502 = vadd.f32 %v470, 1e-05
        %v503 = vadd.f32 %v471, 1e-05
        %v504 = vadd.f32 %v472, 1e-05
        %v505 = vadd.f32 %v473, 1e-05
        %v506 = vadd.f32 %v474, 1e-05
        %v507 = vadd.f32 %v475, 1e-05
        %v508 = vadd.f32 %v476, 1e-05
        %v509 = vadd.f32 %v477, 1e-05
        %v510 = vadd.f32 %v478, 1e-05
        %v511 = vadd.f32 %v479, 1e-05
        %v512 = vadd.f32 %v480, 1e-05
        %v513 = vadd.f32 %v481, 1e-05
        %v514 = vadd.f32 %v482, 1e-05
        %v515 = vadd.f32 %v483, 1e-05
        %v516 = vadd.f32 %v484, 1e-05
        %v517 = vadd.f32 %v485, 1e-05
        %v518 = vadd.f32 %v486, 1e-05
        %v519 = vadd.f32 %v487, 1e-05
        %v520 = vadd.f32 %v488, 1e-05
        %v521 = vadd.f32 %v489, 1e-05
        %v522 = vadd.f32 %v490, 1e-05
        %v523 = vadd.f32 %v491, 1e-05
        %v524 = vadd.f32 %v492, 1e-05
        %v525 = vadd.f32 %v493, 1e-05
        %v526 = vadd.f32 %v494, 1e-05
        %v527 = vrsqrt.pop %v495
        %v528 = vrsqrt.pop %v496
        %v529 = vrsqrt.pop %v497
        %v530 = vrsqrt.pop %v498
        %v531 = vrsqrt.pop %v499
        %v532 = vrsqrt.pop %v500
        %v533 = vrsqrt.pop %v501
        %v534 = vrsqrt.pop %v502
        %v535 = vrsqrt.pop %v503
        %v536 = vrsqrt.pop %v504
        %v537 = vrsqrt.pop %v505
        %v538 = vrsqrt.pop %v506
        %v539 = vrsqrt.pop %v507
        %v540 = vrsqrt.pop %v508
        %v541 = vrsqrt.pop %v509
        %v542 = vrsqrt.pop %v510
        %v543 = vrsqrt.pop %v511
        %v544 = vrsqrt.pop %v512
        %v545 = vrsqrt.pop %v513
        %v546 = vrsqrt.pop %v514
        %v547 = vrsqrt.pop %v515
        %v548 = vrsqrt.pop %v516
        %v549 = vrsqrt.pop %v517
        %v550 = vrsqrt.pop %v518
        %v551 = vrsqrt.pop %v519
        %v552 = vrsqrt.pop %v520
        %v553 = vrsqrt.pop %v521
        %v554 = vrsqrt.pop %v522
        %v555 = vrsqrt.pop %v523
        %v556 = vrsqrt.pop %v524
        %v557 = vrsqrt.pop %v525
        %v558 = vrsqrt.pop %v526
        %v559 = vmul.f32 %v335, %v527
        %v560 = vmul.f32 %v336, %v528
        %v561 = vmul.f32 %v337, %v529
        %v562 = vmul.f32 %v338, %v530
        %v563 = vmul.f32 %v339, %v531
        %v564 = vmul.f32 %v340, %v532
        %v565 = vmul.f32 %v341, %v533
        %v566 = vmul.f32 %v342, %v534
        %v567 = vmul.f32 %v343, %v535
        %v568 = vmul.f32 %v344, %v536
        %v569 = vmul.f32 %v345, %v537
        %v570 = vmul.f32 %v346, %v538
        %v571 = vmul.f32 %v347, %v539
        %v572 = vmul.f32 %v348, %v540
        %v573 = vmul.f32 %v349, %v541
        %v574 = vmul.f32 %v350, %v542
        %v575 = vmul.f32 %v351, %v543
        %v576 = vmul.f32 %v352, %v544
        %v577 = vmul.f32 %v353, %v545
        %v578 = vmul.f32 %v354, %v546
        %v579 = vmul.f32 %v355, %v547
        %v580 = vmul.f32 %v356, %v548
        %v581 = vmul.f32 %v357, %v549
        %v582 = vmul.f32 %v358, %v550
        %v583 = vmul.f32 %v359, %v551
        %v584 = vmul.f32 %v360, %v552
        %v585 = vmul.f32 %v361, %v553
        %v586 = vmul.f32 %v362, %v554
        %v587 = vmul.f32 %v363, %v555
        %v588 = vmul.f32 %v364, %v556
        %v589 = vmul.f32 %v365, %v557
        %v590 = vmul.f32 %v366, %v558
        %v591 = vpack.c.bf16 %v560, %v559
        %v592 = vpack.c.bf16 %v562, %v561
        %v593 = vpack.c.bf16 %v564, %v563
        %v594 = vpack.c.bf16 %v566, %v565
        %v595 = vpack.c.bf16 %v568, %v567
        %v596 = vpack.c.bf16 %v570, %v569
        %v597 = vpack.c.bf16 %v572, %v571
        %v598 = vpack.c.bf16 %v574, %v573
        %v599 = vpack.c.bf16 %v576, %v575
        %v600 = vpack.c.bf16 %v578, %v577
        %v601 = vpack.c.bf16 %v580, %v579
        %v602 = vpack.c.bf16 %v582, %v581
        %v603 = vpack.c.bf16 %v584, %v583
        %v604 = vpack.c.bf16 %v586, %v585
        %v605 = vpack.c.bf16 %v588, %v587
        %v606 = vpack.c.bf16 %v590, %v589
        %v607 = vld [vmem:[#allocation5] sm:$0xf]
        %v608 = vld [vmem:[#allocation5 + $0x4] sm:$0xf]
        %v609 = vld [vmem:[#allocation5 + $0x8] sm:$0xf]
        %v610 = vld [vmem:[#allocation5 + $0xc] sm:$0xf]
        %v611 = vld [vmem:[#allocation5 + $0x10] sm:$0xf]
        %v612 = vld [vmem:[#allocation5 + $0x14] sm:$0xf]
        %v613 = vld [vmem:[#allocation5 + $0x18] sm:$0xf]
        %v614 = vld [vmem:[#allocation5 + $0x1c] sm:$0xf]
        %v615 = vld [vmem:[#allocation5 + $0x20] sm:$0xf]
        %v616 = vld [vmem:[#allocation5 + $0x24] sm:$0xf]
        %v617 = vld [vmem:[#allocation5 + $0x28] sm:$0xf]
        %v618 = vld [vmem:[#allocation5 + $0x2c] sm:$0xf]
        %v619 = vld [vmem:[#allocation5 + $0x30] sm:$0xf]
        %v620 = vld [vmem:[#allocation5 + $0x34] sm:$0xf]
        %v621 = vld [vmem:[#allocation5 + $0x38] sm:$0xf]
        %v622 = vld [vmem:[#allocation5 + $0x3c] sm:$0xf]
        %v623 = vld [vmem:[%s2] sm:$0x1]
        %v625 = vlaneseq
        %v626 = vshrl.u32 %v625, 7
        %v627 = vsub.s32 0, %v626
        %v628 = vrot.slane %v623, %v627
        %v646 = vunpack.c.l.b16 %v607
        %v647 = vunpack.c.l.b16 %v608
        %v648 = vunpack.c.l.b16 %v609
        %v649 = vunpack.c.l.b16 %v610
        %v650 = vunpack.c.l.b16 %v611
        %v651 = vunpack.c.l.b16 %v612
        %v652 = vunpack.c.l.b16 %v613
        %v653 = vunpack.c.l.b16 %v614
        %v654 = vunpack.c.l.b16 %v615
        %v655 = vunpack.c.l.b16 %v616
        %v656 = vunpack.c.l.b16 %v617
        %v657 = vunpack.c.l.b16 %v618
        %v658 = vunpack.c.l.b16 %v619
        %v659 = vunpack.c.l.b16 %v620
        %v660 = vunpack.c.l.b16 %v621
        %v661 = vunpack.c.l.b16 %v622
        %v662 = vpack.c.b16 %v647, %v646
        %v663 = vpack.c.b16 %v649, %v648
        %v664 = vpack.c.b16 %v651, %v650
        %v665 = vpack.c.b16 %v653, %v652
        %v666 = vpack.c.b16 %v655, %v654
        %v667 = vpack.c.b16 %v657, %v656
        %v668 = vpack.c.b16 %v659, %v658
        %v669 = vpack.c.b16 %v661, %v660
        %678 = vmatprep.subr.bf16.mxu0 0
        %679 = vmatpush1.bf16.msra.mxu0 %v662
        %680 = vmatprep.subr.bf16.mxu0 0
        %681 = vmatpush1.bf16.msra.mxu0 %v663
        %682 = vmatprep.subr.bf16.mxu0 0
        %683 = vmatpush1.bf16.msra.mxu0 %v664
        %684 = vmatprep.subr.bf16.mxu0 0
        %685 = vmatpush1.bf16.msra.mxu0 %v665
        %686 = vmatprep.subr.bf16.mxu0 0
        %687 = vmatpush1.bf16.msra.mxu0 %v666
        %688 = vmatprep.subr.bf16.mxu0 0
        %689 = vmatpush1.bf16.msra.mxu0 %v667
        %690 = vmatprep.subr.bf16.mxu0 0
        %691 = vmatpush1.bf16.msra.mxu0 %v668
        %692 = vmatprep.subr.bf16.mxu0 0
        %693 = vmatpush1.bf16.msra.mxu0 %v669
        %694 = vmatprep.subr.bf16.mxu0 0
        %695 = vmatpush1.bf16.msra.mxu0 0
        %696 = vmatprep.subr.bf16.mxu0 0
        %697 = vmatpush1.bf16.msra.mxu0 0
        %698 = vmatprep.subr.bf16.mxu0 0
        %699 = vmatpush1.bf16.msra.mxu0 0
        %700 = vmatprep.subr.bf16.mxu0 0
        %701 = vmatpush1.bf16.msra.mxu0 0
        %702 = vmatprep.subr.bf16.mxu0 0
        %703 = vmatpush1.bf16.msra.mxu0 0
        %704 = vmatprep.subr.bf16.mxu0 0
        %705 = vmatpush1.bf16.msra.mxu0 0
        %706 = vmatprep.subr.bf16.mxu0 0
        %707 = vmatpush1.bf16.msra.mxu0 0
        %708 = vmatprep.subr.bf16.mxu0 0
        %709 = vmatpush1.bf16.msra.mxu0 0
        %710 = vmatprep.mubr.bf16.mxu0 0
        %711 = vmatmul.mubr.bf16.gmra.mrb[0].mxu0 %v591
        %v712 = vpop.f32.mrb[0].mxu0
        %v713 = vadd.f32 %v628, %v712
        %v714 = vpop.f32.mrb[0].mxu0
        %v715 = vpop.f32.mrb[0].mxu0
        %v716 = vadd.f32 %v628, %v715
        %v717 = vpop.f32.mrb[0].mxu0
        %718 = vmatprep.mubr.bf16.mxu0 0
        %719 = vmatmul.mubr.bf16.gmra.mrb[0].mxu0 %v592
        %v720 = vpop.f32.mrb[0].mxu0
        %v721 = vadd.f32 %v628, %v720
        %v722 = vpop.f32.mrb[0].mxu0
        %v723 = vpop.f32.mrb[0].mxu0
        %v724 = vadd.f32 %v628, %v723
        %v725 = vpop.f32.mrb[0].mxu0
        %726 = vmatprep.mubr.bf16.mxu0 0
        %727 = vmatmul.mubr.bf16.gmra.mrb[0].mxu0 %v593
        %v728 = vpop.f32.mrb[0].mxu0
        %v729 = vadd.f32 %v628, %v728
        %v730 = vpop.f32.mrb[0].mxu0
        %v731 = vpop.f32.mrb[0].mxu0
        %v732 = vadd.f32 %v628, %v731
        %v733 = vpop.f32.mrb[0].mxu0
        %734 = vmatprep.mubr.bf16.mxu0 0
        %735 = vmatmul.mubr.bf16.gmra.mrb[0].mxu0 %v594
        %v736 = vpop.f32.mrb[0].mxu0
        %v737 = vadd.f32 %v628, %v736
        %v738 = vpop.f32.mrb[0].mxu0
        %v739 = vpop.f32.mrb[0].mxu0
        %v740 = vadd.f32 %v628, %v739
        %v741 = vpop.f32.mrb[0].mxu0
        %742 = vmatprep.mubr.bf16.mxu0 0
        %743 = vmatmul.mubr.bf16.gmra.mrb[0].mxu0 %v595
        %v744 = vpop.f32.mrb[0].mxu0
        %v745 = vadd.f32 %v628, %v744
        %v746 = vpop.f32.mrb[0].mxu0
        %v747 = vpop.f32.mrb[0].mxu0
        %v748 = vadd.f32 %v628, %v747
        %v749 = vpop.f32.mrb[0].mxu0
        %750 = vmatprep.mubr.bf16.mxu0 0
        %751 = vmatmul.mubr.bf16.gmra.mrb[0].mxu0 %v596
        %v752 = vpop.f32.mrb[0].mxu0
        %v753 = vadd.f32 %v628, %v752
        %v754 = vpop.f32.mrb[0].mxu0
        %v755 = vpop.f32.mrb[0].mxu0
        %v756 = vadd.f32 %v628, %v755
        %v757 = vpop.f32.mrb[0].mxu0
        %758 = vmatprep.mubr.bf16.mxu0 0
        %759 = vmatmul.mubr.bf16.gmra.mrb[0].mxu0 %v597
        %v760 = vpop.f32.mrb[0].mxu0
        %v761 = vadd.f32 %v628, %v760
        %v762 = vpop.f32.mrb[0].mxu0
        %v763 = vpop.f32.mrb[0].mxu0
        %v764 = vadd.f32 %v628, %v763
        %v765 = vpop.f32.mrb[0].mxu0
        %766 = vmatprep.mubr.bf16.mxu0 0
        %767 = vmatmul.mubr.bf16.gmra.mrb[0].mxu0 %v598
        %v768 = vpop.f32.mrb[0].mxu0
        %v769 = vadd.f32 %v628, %v768
        %v770 = vpop.f32.mrb[0].mxu0
        %v771 = vpop.f32.mrb[0].mxu0
        %v772 = vadd.f32 %v628, %v771
        %v773 = vpop.f32.mrb[0].mxu0
        %774 = vmatprep.mubr.bf16.mxu0 0
        %775 = vmatmul.mubr.bf16.gmra.mrb[0].mxu0 %v599
        %v776 = vpop.f32.mrb[0].mxu0
        %v777 = vadd.f32 %v628, %v776
        %v778 = vpop.f32.mrb[0].mxu0
        %v779 = vpop.f32.mrb[0].mxu0
        %v780 = vadd.f32 %v628, %v779
        %v781 = vpop.f32.mrb[0].mxu0
        %782 = vmatprep.mubr.bf16.mxu0 0
        %783 = vmatmul.mubr.bf16.gmra.mrb[0].mxu0 %v600
        %v784 = vpop.f32.mrb[0].mxu0
        %v785 = vadd.f32 %v628, %v784
        %v786 = vpop.f32.mrb[0].mxu0
        %v787 = vpop.f32.mrb[0].mxu0
        %v788 = vadd.f32 %v628, %v787
        %v789 = vpop.f32.mrb[0].mxu0
        %790 = vmatprep.mubr.bf16.mxu0 0
        %791 = vmatmul.mubr.bf16.gmra.mrb[0].mxu0 %v601
        %v792 = vpop.f32.mrb[0].mxu0
        %v793 = vadd.f32 %v628, %v792
        %v794 = vpop.f32.mrb[0].mxu0
        %v795 = vpop.f32.mrb[0].mxu0
        %v796 = vadd.f32 %v628, %v795
        %v797 = vpop.f32.mrb[0].mxu0
        %798 = vmatprep.mubr.bf16.mxu0 0
        %799 = vmatmul.mubr.bf16.gmra.mrb[0].mxu0 %v602
        %v800 = vpop.f32.mrb[0].mxu0
        %v801 = vadd.f32 %v628, %v800
        %v802 = vpop.f32.mrb[0].mxu0
        %v803 = vpop.f32.mrb[0].mxu0
        %v804 = vadd.f32 %v628, %v803
        %v805 = vpop.f32.mrb[0].mxu0
        %806 = vmatprep.mubr.bf16.mxu0 0
        %807 = vmatmul.mubr.bf16.gmra.mrb[0].mxu0 %v603
        %v808 = vpop.f32.mrb[0].mxu0
        %v809 = vadd.f32 %v628, %v808
        %v810 = vpop.f32.mrb[0].mxu0
        %v811 = vpop.f32.mrb[0].mxu0
        %v812 = vadd.f32 %v628, %v811
        %v813 = vpop.f32.mrb[0].mxu0
        %814 = vmatprep.mubr.bf16.mxu0 0
        %815 = vmatmul.mubr.bf16.gmra.mrb[0].mxu0 %v604
        %v816 = vpop.f32.mrb[0].mxu0
        %v817 = vadd.f32 %v628, %v816
        %v818 = vpop.f32.mrb[0].mxu0
        %v819 = vpop.f32.mrb[0].mxu0
        %v820 = vadd.f32 %v628, %v819
        %v821 = vpop.f32.mrb[0].mxu0
        %822 = vmatprep.mubr.bf16.mxu0 0
        %823 = vmatmul.mubr.bf16.gmra.mrb[0].mxu0 %v605
        %v824 = vpop.f32.mrb[0].mxu0
        %v825 = vadd.f32 %v628, %v824
        %v826 = vpop.f32.mrb[0].mxu0
        %v827 = vpop.f32.mrb[0].mxu0
        %v828 = vadd.f32 %v628, %v827
        %v829 = vpop.f32.mrb[0].mxu0
        %830 = vmatprep.mubr.bf16.mxu0 0
        %831 = vmatmul.mubr.bf16.gmra.mrb[0].mxu0 %v606
        %v832 = vpop.f32.mrb[0].mxu0
        %v833 = vadd.f32 %v628, %v832
        %v834 = vpop.f32.mrb[0].mxu0
        %v835 = vpop.f32.mrb[0].mxu0
        %v836 = vadd.f32 %v628, %v835
        %v837 = vpop.f32.mrb[0].mxu0
        %838 = vdwg.mxu0
        %v839 = vadd.f32 %v713, %v207
        %v840 = vadd.f32 %v716, %v208
        %v841 = vadd.f32 %v721, %v209
        %v842 = vadd.f32 %v724, %v210
        %v843 = vadd.f32 %v729, %v211
        %v844 = vadd.f32 %v732, %v212
        %v845 = vadd.f32 %v737, %v213
        %v846 = vadd.f32 %v740, %v214
        %v847 = vadd.f32 %v745, %v215
        %v848 = vadd.f32 %v748, %v216
        %v849 = vadd.f32 %v753, %v217
        %v850 = vadd.f32 %v756, %v218
        %v851 = vadd.f32 %v761, %v219
        %v852 = vadd.f32 %v764, %v220
        %v853 = vadd.f32 %v769, %v221
        %v854 = vadd.f32 %v772, %v222
        %v855 = vadd.f32 %v777, %v223
        %v856 = vadd.f32 %v780, %v224
        %v857 = vadd.f32 %v785, %v225
        %v858 = vadd.f32 %v788, %v226
        %v859 = vadd.f32 %v793, %v227
        %v860 = vadd.f32 %v796, %v228
        %v861 = vadd.f32 %v801, %v229
        %v862 = vadd.f32 %v804, %v230
        %v863 = vadd.f32 %v809, %v231
        %v864 = vadd.f32 %v812, %v232
        %v865 = vadd.f32 %v817, %v233
        %v866 = vadd.f32 %v820, %v234
        %v867 = vadd.f32 %v825, %v235
        %v868 = vadd.f32 %v828, %v236
        %v869 = vadd.f32 %v833, %v237
        %v870 = vadd.f32 %v836, %v238
        %871 = vst [vmem:[%s203] sm:$0xff] %v839
        %872 = vst [vmem:[%s203 + $0x8] sm:$0xff] %v840
        %873 = vst [vmem:[%s203 + $0x10] sm:$0xff] %v841
        %874 = vst [vmem:[%s203 + $0x18] sm:$0xff] %v842
        %875 = vst [vmem:[%s203 + $0x20] sm:$0xff] %v843
        %876 = vst [vmem:[%s203 + $0x28] sm:$0xff] %v844
        %877 = vst [vmem:[%s203 + $0x30] sm:$0xff] %v845
        %878 = vst [vmem:[%s203 + $0x38] sm:$0xff] %v846
        %879 = vst [vmem:[%s203 + $0x40] sm:$0xff] %v847
        %880 = vst [vmem:[%s203 + $0x48] sm:$0xff] %v848
        %881 = vst [vmem:[%s203 + $0x50] sm:$0xff] %v849
        %882 = vst [vmem:[%s203 + $0x58] sm:$0xff] %v850
        %883 = vst [vmem:[%s203 + $0x60] sm:$0xff] %v851
        %884 = vst [vmem:[%s203 + $0x68] sm:$0xff] %v852
        %885 = vst [vmem:[%s203 + $0x70] sm:$0xff] %v853
        %886 = vst [vmem:[%s203 + $0x78] sm:$0xff] %v854
        %887 = vst [vmem:[%s203 + $0x80] sm:$0xff] %v855
        %888 = vst [vmem:[%s203 + $0x88] sm:$0xff] %v856
        %889 = vst [vmem:[%s203 + $0x90] sm:$0xff] %v857
        %890 = vst [vmem:[%s203 + $0x98] sm:$0xff] %v858
        %891 = vst [vmem:[%s203 + $0xa0] sm:$0xff] %v859
        %892 = vst [vmem:[%s203 + $0xa8] sm:$0xff] %v860
        %893 = vst [vmem:[%s203 + $0xb0] sm:$0xff] %v861
        %894 = vst [vmem:[%s203 + $0xb8] sm:$0xff] %v862
        %895 = vst [vmem:[%s203 + $0xc0] sm:$0xff] %v863
        %896 = vst [vmem:[%s203 + $0xc8] sm:$0xff] %v864
        %897 = vst [vmem:[%s203 + $0xd0] sm:$0xff] %v865
        %898 = vst [vmem:[%s203 + $0xd8] sm:$0xff] %v866
        %899 = vst [vmem:[%s203 + $0xe0] sm:$0xff] %v867
        %900 = vst [vmem:[%s203 + $0xe8] sm:$0xff] %v868
        %901 = vst [vmem:[%s203 + $0xf0] sm:$0xff] %v869
        %902 = vst [vmem:[%s203 + $0xf8] sm:$0xff] %v870
        %s903 = sand.u32 %s97, 1
        %s904 = scalar_lea.sflag [#allocation4], %s903
        %s905 = sand.u32 %s97, 1
        %s906 = smul.addr %s905, 256
        %s907 = scalar_lea.vmem [#allocation7], %s906
        // Predicated region
        $region41: #{tpu_custom_call.1} parent=31 // pred_check
          %p908 = pneg %p107
        $region42: #{tpu_custom_call.1} parent=31 // pred_check_branch
          %910 = sbr.rel (%p908) target = $region44
        $region43: #{tpu_custom_call.1} parent=31 // pred_region
          %s911 = smul.u32 32, %s21
          %s913 = ssub.s32 4096, 4096
          %914 = vsyncadd %s904, %s913
          %s915 = smul.addr %s911, 128
          %s916 = scalar_lea.hbm %s3, %s915
          %s917 = sshll.u32 %s907, 4
          %s918 = int_to_ptr.vmem [resolvable:$true] %s917
          %923 = dma.vmem_to_hbm [thread:$0]  %s918, 4096, %s916, %s904, 128, 128, 8
        $region44: #{tpu_custom_call.1} parent=31 // pred_fallthru
          _
      $region32: #{tpu_custom_call.1} parent=5 // pred_fallthru
        _
      %p924 = scmp.le.s32.totalorder 2, %s16
      // Predicated region
      $region45: #{tpu_custom_call.1} parent=5 // pred_check
        %p925 = pneg %p924
      $region46: #{tpu_custom_call.1} parent=5 // pred_check_branch
        %927 = sbr.rel (%p925) target = $region48
      $region47: #{tpu_custom_call.1} parent=5 // pred_region
        %s928 = ssub.s32 %s16, 2
        // Predicated region
        $region49: #{tpu_custom_call.1} parent=47 // pred_check
          %p929 = pneg %p113
        $region50: #{tpu_custom_call.1} parent=47 // pred_check_branch
          %931 = sbr.rel (%p929) target = $region52
        $region51: #{tpu_custom_call.1} parent=47 // pred_region
          %s932 = sand.u32 %s98, 1
          %s933 = scalar_lea.sflag [#allocation4], %s932
          %s934 = sand.u32 %s98, 1
          %s935 = smul.addr %s934, 256
          %s936 = scalar_lea.vmem [#allocation7], %s935
          %937 = dma.done %s933, 4096
        $region52: #{tpu_custom_call.1} parent=47 // pred_fallthru
          _
      $region48: #{tpu_custom_call.1} parent=5 // pred_fallthru
        _
    $region6: #{tpu_custom_call.1} parent=1 // loop_footer
      %s20 = sadd.s32 1, %s16
    $region7: #{tpu_custom_call.1} parent=1 // loop_footer_branch
      %15 = sbr.rel target = $region3
    $region8: #{tpu_custom_call.1} parent=1 // loop_exit
      _
    %938 = vsyncpa [#allocation3], 1
    %s939 = scalar_lea.sflag [#allocation3], 1
    %940 = vsyncpa %s939, 1
    %941 = vsyncpa [#allocation6], 1
    %942 = vsyncpa [#allocation4], 1
    %s943 = scalar_lea.sflag [#allocation4], 1
    %944 = vsyncpa %s943, 1

</llo_original>
